<compile_context>
chip_gen: v6e
topology: v6e:2x2x1
jax: 0.10.0
libtpu: 0.0.40
codegen_flags: <defaults>
</compile_context>

<pallas_src>
import jax
import jax.numpy as jnp
from jax import lax
from jax.experimental import pallas as pl
from jax.experimental.pallas import tpu as pltpu
import numpy as np

EPS = 1e-5      # nn.BatchNorm2d default eps
MULT = 0.2      # WideBlock mult
NI, NF = 4, 8   # ni != nf -> shortcut is a 1x1 conv
STRIDE = 1      # TODO(synk): stride > 1 not implemented in this synthetic kernel

_VMEM = pl.BlockSpec(memory_space=pltpu.MemorySpace.VMEM)


# ---------------- fused Pallas kernel ----------------------------------------

def _make_kernel(n, h, w, cp, co):
    """Fused WideBlock kernel for static shapes. cp = padded input channels."""
    hw = h * w
    L = n * hw                      # batched lane extent (samples concatenated)
    inv = 1.0 / L                   # BN divisor (biased variance over N*H*W)
    pow2 = (w & (w - 1) == 0) and (hw & (hw - 1) == 0)

    def kernel(x_ref, wslab_ref, pslab_ref, out_ref):
        f32 = jnp.float32

        # ---- per-pixel boundary masks for the 9 conv taps (built once) ------
        q = lax.broadcasted_iota(jnp.int32, (1, L), 1)
        if pow2:
            col = jnp.bitwise_and(q, w - 1)
            row = jnp.bitwise_and(jnp.right_shift(q, int(np.log2(w))), h - 1)
        else:
            col = q % w
            row = (q // w) % h
        masks = {}
        for dh in (-1, 0, 1):
            for dw in (-1, 0, 1):
                conds = []
                if dh == -1:
                    conds.append(row >= 1)
                if dh == 1:
                    conds.append(row <= h - 2)
                if dw == -1:
                    conds.append(col >= 1)
                if dw == 1:
                    conds.append(col <= w - 2)
                if conds:
                    m = conds[0]
                    for c_ in conds[1:]:
                        m = jnp.logical_and(m, c_)
                    masks[(dh, dw)] = m.astype(f32)
                else:
                    masks[(dh, dw)] = None          # centre row/col: no mask

        def patches(v):
            # v: (C, L) lane-dense.  3x3 'same'-conv im2col (9*C, L) built with
            # lane rolls + boundary masks; masks also kill any cross-sample
            # leakage at the per-sample hw boundaries.
            blocks = []
            for dh in (-1, 0, 1):
                for dw in (-1, 0, 1):
                    d = dh * w + dw
                    t = v if d == 0 else pltpu.roll(v, (-d) % L, 1)
                    m = masks[(dh, dw)]
                    if m is not None:
                        t = t * m
                    blocks.append(t)
            return jnp.concatenate(blocks, axis=0)

        # ---- packed weights (bf16): [conv1 ; shortcut-centre-tap ; conv2] ----
        w_stack = wslab_ref[0:2 * co, :]            # (2*co, 9*cp)
        w2m = wslab_ref[2 * co:3 * co, :]           # (co,   9*co)

        # ---- packed per-channel parameters (f32 columns) ---------------------
        ps = pslab_ref[...]                          # (cp, 5)
        g1, be1 = ps[:, 0:1], ps[:, 1:2]
        g2, be2 = ps[:, 2:3], ps[:, 3:4]
        cadd = ps[:, 4:5]                            # b2*MULT + bs

        # ---- BN1 (train-mode batch stats, single pass) + ReLU ----------------
        xall = jnp.concatenate([x_ref[s] for s in range(n)], axis=1)   # (cp, L)
        m1 = jnp.sum(xall, axis=1, keepdims=True) * inv
        e1 = jnp.sum(xall * xall, axis=1, keepdims=True) * inv
        scale1 = g1 * lax.rsqrt((e1 - m1 * m1) + EPS)
        x2 = jnp.maximum(xall * scale1 + (be1 - m1 * scale1), 0.0)     # (cp, L)

        # ---- conv1 (3x3) + folded 1x1 shortcut: ONE batched im2col GEMM ------
        p1 = patches(x2).astype(jnp.bfloat16)                          # (9*cp, L)
        res = jnp.dot(w_stack, p1, preferred_element_type=jnp.float32)  # (2co, L)
        c1 = res[0:co, :]          # conv1(x2); b1 dropped (cancelled by BN2 mean)
        r = res[co:2 * co, :]      # shortcut(x2); bias folded into cadd

        # ---- BN2 (batch stats) + ReLU ----------------------------------------
        m2 = jnp.sum(c1, axis=1, keepdims=True) * inv
        e2 = jnp.sum(c1 * c1, axis=1, keepdims=True) * inv
        scale2 = g2 * lax.rsqrt((e2 - m2 * m2) + EPS)
        hmid = jnp.maximum(c1 * scale2 + (be2 - m2 * scale2), 0.0)     # (co, L)

        # ---- conv2 (3x3) * mult + residual -----------------------------------
        p2 = patches(hmid).astype(jnp.bfloat16)                        # (9*co, L)
        c2 = jnp.dot(w2m, p2, preferred_element_type=jnp.float32)      # (co, L)
        y = c2 * MULT + r + cadd

        for s in range(n):   # lane-aligned (multiple-of-hw) slices, dense stores
            out_ref[s] = y[:, s * hw:(s + 1) * hw]

    return kernel


# ---------------- wrapper -----------------------------------------------------

@jax.jit
def wide_block_forward(x_nchw, params):
    g1, be1, w1, b1, g2, be2, w2, b2, ws, bs = params
    del b1   # exactly cancelled by train-mode BN2 mean subtraction -> dead work
    n, ci, h, w = x_nchw.shape
    co = w1.shape[-1]
    hw = h * w
    cp = 8   # pad input channels to one f32 sublane tile
    assert ci <= cp and co == cp, "synthetic kernel specialised for ni<=8, nf==8"

    # x: (N, ci, H, W) -> (N, cp, H*W) f32; zero-pad channels (no NCHW<->NHWC).
    x = x_nchw.reshape(n, ci, hw).astype(jnp.float32)
    x = jnp.pad(x, ((0, 0), (0, cp - ci), (0, 0)))

    # Weight slab (bf16). Contraction column order = (kh, kw, c_in), padded to cp.
    w1m = jnp.pad(jnp.transpose(w1, (3, 0, 1, 2)).astype(jnp.float32),
                  ((0, 0), (0, 0), (0, 0), (0, cp - ci))).reshape(co, 9 * cp)
    wsp = jnp.pad(ws.T.astype(jnp.float32), ((0, 0), (0, cp - ci)))    # (co, cp)
    wshort = jnp.concatenate(                                          # centre tap only
        [jnp.zeros((co, 4 * cp), jnp.float32), wsp, jnp.zeros((co, 4 * cp), jnp.float32)],
        axis=1)
    w2m = jnp.transpose(w2, (3, 0, 1, 2)).astype(jnp.float32).reshape(co, 9 * co)
    wslab = jnp.concatenate([w1m, wshort, w2m], axis=0).astype(jnp.bfloat16)  # (3co, 9cp)

    # Per-channel parameter slab (f32): columns = [g1, be1, g2, be2, b2*mult+bs].
    def colpad(v):
        v = v.astype(jnp.float32).reshape(-1, 1)
        return jnp.pad(v, ((0, cp - v.shape[0]), (0, 0)))
    cadd = b2.astype(jnp.float32) * MULT + bs.astype(jnp.float32)
    pslab = jnp.concatenate(
        [colpad(g1), colpad(be1), colpad(g2), colpad(be2), colpad(cadd)], axis=1)

    out = pl.pallas_call(
        _make_kernel(n, h, w, cp, co),
        out_shape=jax.ShapeDtypeStruct((n, co, hw), jnp.float32),
        in_specs=[_VMEM] * 3,
        out_specs=_VMEM,
    )(x, wslab, pslab)

    return out.reshape(n, co, h, w)   # free reshape back to NCHW


# ---------------- pure-JAX reference (for verification only) ------------------

def ref_forward(x_nchw, params):
    g1, be1, w1, b1, g2, be2, w2, b2, ws, bs = params
    x = jnp.transpose(x_nchw, (0, 2, 3, 1)).astype(jnp.float32)
    dn = ("NHWC", "HWIO", "NHWC")

    def bn_relu(v, g, b):
        m = v.mean(axis=(0, 1, 2), keepdims=True)
        var = ((v - m) ** 2).mean(axis=(0, 1, 2), keepdims=True)
        return jnp.maximum((v - m) / jnp.sqrt(var + EPS) * g.reshape(1, 1, 1, -1)
                           + b.reshape(1, 1, 1, -1), 0.0)

    x2 = bn_relu(x, g1, be1)
    r = lax.conv_general_dilated(x2, ws.reshape(1, 1, NI, NF), (1, 1), "SAME",
                                 dimension_numbers=dn,
                                 precision=lax.Precision.HIGHEST) + bs.reshape(1, 1, 1, -1)
    c1 = lax.conv_general_dilated(x2, w1, (1, 1), "SAME", dimension_numbers=dn,
                                  precision=lax.Precision.HIGHEST) + b1.reshape(1, 1, 1, -1)
    hmid = bn_relu(c1, g2, be2)
    c2 = lax.conv_general_dilated(hmid, w2, (1, 1), "SAME", dimension_numbers=dn,
                                  precision=lax.Precision.HIGHEST) + b2.reshape(1, 1, 1, -1)
    out = c2 * MULT + r
    return jnp.transpose(out, (0, 3, 1, 2))


if __name__ == "__main__":
    key = jax.random.PRNGKey(0)
    ks = jax.random.split(key, 7)
    N, H, W = 2, 16, 16
    x_nchw = jax.random.normal(ks[0], (N, NI, H, W), jnp.float32)

    # Deterministic parameters (shapes from WideBlock.__init__, ni=4, nf=8, stride=1).
    g1 = jnp.ones((NI,), jnp.float32)        # BatchNorm2d default: weight = 1
    be1 = jnp.zeros((NI,), jnp.float32)      # bias = 0
    w1 = 0.1 * jax.random.normal(ks[1], (3, 3, NI, NF), jnp.float32)   # conv1 (HWIO)
    b1 = 0.1 * jax.random.normal(ks[2], (NF,), jnp.float32)
    g2 = jnp.ones((NF,), jnp.float32)        # _bn(nf, init_zero=False): weight = 1
    be2 = jnp.zeros((NF,), jnp.float32)
    w2 = 0.1 * jax.random.normal(ks[3], (3, 3, NF, NF), jnp.float32)   # conv2 (HWIO)
    b2 = 0.1 * jax.random.normal(ks[4], (NF,), jnp.float32)
    ws = 0.1 * jax.random.normal(ks[5], (NI, NF), jnp.float32)         # 1x1 shortcut
    bs = 0.1 * jax.random.normal(ks[6], (NF,), jnp.float32)
    params = (g1, be1, w1, b1, g2, be2, w2, b2, ws, bs)

    out = jax.block_until_ready(wide_block_forward(x_nchw, params))
    assert out.shape == (N, NF, H, W), out.shape

    ref = ref_forward(x_nchw, params)
    np.testing.assert_allclose(np.asarray(out), np.asarray(ref), rtol=2e-2, atol=2e-2)
    print("KERNEL_OK")
</pallas_src>

<mosaic_0001>
module attributes {stable_mosaic.version = 11 : i64} {
  func.func @kernel(%arg0: memref<2x8x256xf32, #tpu.memory_space<vmem>>, %arg1: memref<24x72xbf16, #tpu.memory_space<vmem>>, %arg2: memref<8x5xf32, #tpu.memory_space<vmem>>, %arg3: memref<2x8x256xf32, #tpu.memory_space<vmem>>) attributes {dimension_semantics = [], scalar_prefetch = 0 : i64, scratch_operands = 0 : i64, tpu.core_type = #tpu.core_type<tc>} {
    %0 = tpu.iota {dimensions = array<i32: 1>} : vector<1x512xi32>
    %c15_i32 = arith.constant 15 : i32
    %1 = vector.broadcast %c15_i32 : i32 to vector<1x512xi32>
    %2 = arith.andi %0, %1 : vector<1x512xi32>
    %c4_i32 = arith.constant 4 : i32
    %3 = vector.broadcast %c4_i32 : i32 to vector<1x512xi32>
    %4 = arith.shrsi %0, %3 : vector<1x512xi32>
    %c15_i32_0 = arith.constant 15 : i32
    %5 = vector.broadcast %c15_i32_0 : i32 to vector<1x512xi32>
    %6 = arith.andi %4, %5 : vector<1x512xi32>
    %c1_i32 = arith.constant 1 : i32
    %7 = vector.broadcast %c1_i32 : i32 to vector<1x512xi32>
    %8 = arith.cmpi sge, %6, %7 : vector<1x512xi32>
    %c1_i32_1 = arith.constant 1 : i32
    %9 = vector.broadcast %c1_i32_1 : i32 to vector<1x512xi32>
    %10 = arith.cmpi sge, %2, %9 : vector<1x512xi32>
    %11 = arith.andi %8, %10 : vector<1x512xi1>
    %12 = arith.extui %11 : vector<1x512xi1> to vector<1x512xi32>
    %13 = arith.sitofp %12 : vector<1x512xi32> to vector<1x512xf32>
    %c1_i32_2 = arith.constant 1 : i32
    %14 = vector.broadcast %c1_i32_2 : i32 to vector<1x512xi32>
    %15 = arith.cmpi sge, %6, %14 : vector<1x512xi32>
    %16 = arith.extui %15 : vector<1x512xi1> to vector<1x512xi32>
    %17 = arith.sitofp %16 : vector<1x512xi32> to vector<1x512xf32>
    %c1_i32_3 = arith.constant 1 : i32
    %18 = vector.broadcast %c1_i32_3 : i32 to vector<1x512xi32>
    %19 = arith.cmpi sge, %6, %18 : vector<1x512xi32>
    %c14_i32 = arith.constant 14 : i32
    %20 = vector.broadcast %c14_i32 : i32 to vector<1x512xi32>
    %21 = arith.cmpi sle, %2, %20 : vector<1x512xi32>
    %22 = arith.andi %19, %21 : vector<1x512xi1>
    %23 = arith.extui %22 : vector<1x512xi1> to vector<1x512xi32>
    %24 = arith.sitofp %23 : vector<1x512xi32> to vector<1x512xf32>
    %c1_i32_4 = arith.constant 1 : i32
    %25 = vector.broadcast %c1_i32_4 : i32 to vector<1x512xi32>
    %26 = arith.cmpi sge, %2, %25 : vector<1x512xi32>
    %27 = arith.extui %26 : vector<1x512xi1> to vector<1x512xi32>
    %28 = arith.sitofp %27 : vector<1x512xi32> to vector<1x512xf32>
    %c14_i32_5 = arith.constant 14 : i32
    %29 = vector.broadcast %c14_i32_5 : i32 to vector<1x512xi32>
    %30 = arith.cmpi sle, %2, %29 : vector<1x512xi32>
    %31 = arith.extui %30 : vector<1x512xi1> to vector<1x512xi32>
    %32 = arith.sitofp %31 : vector<1x512xi32> to vector<1x512xf32>
    %c14_i32_6 = arith.constant 14 : i32
    %33 = vector.broadcast %c14_i32_6 : i32 to vector<1x512xi32>
    %34 = arith.cmpi sle, %6, %33 : vector<1x512xi32>
    %c1_i32_7 = arith.constant 1 : i32
    %35 = vector.broadcast %c1_i32_7 : i32 to vector<1x512xi32>
    %36 = arith.cmpi sge, %2, %35 : vector<1x512xi32>
    %37 = arith.andi %34, %36 : vector<1x512xi1>
    %38 = arith.extui %37 : vector<1x512xi1> to vector<1x512xi32>
    %39 = arith.sitofp %38 : vector<1x512xi32> to vector<1x512xf32>
    %c14_i32_8 = arith.constant 14 : i32
    %40 = vector.broadcast %c14_i32_8 : i32 to vector<1x512xi32>
    %41 = arith.cmpi sle, %6, %40 : vector<1x512xi32>
    %42 = arith.extui %41 : vector<1x512xi1> to vector<1x512xi32>
    %43 = arith.sitofp %42 : vector<1x512xi32> to vector<1x512xf32>
    %c14_i32_9 = arith.constant 14 : i32
    %44 = vector.broadcast %c14_i32_9 : i32 to vector<1x512xi32>
    %45 = arith.cmpi sle, %6, %44 : vector<1x512xi32>
    %c14_i32_10 = arith.constant 14 : i32
    %46 = vector.broadcast %c14_i32_10 : i32 to vector<1x512xi32>
    %47 = arith.cmpi sle, %2, %46 : vector<1x512xi32>
    %48 = arith.andi %45, %47 : vector<1x512xi1>
    %49 = arith.extui %48 : vector<1x512xi1> to vector<1x512xi32>
    %50 = arith.sitofp %49 : vector<1x512xi32> to vector<1x512xf32>
    %c0 = arith.constant 0 : index
    %c0_11 = arith.constant 0 : index
    %51 = vector.load %arg1[%c0, %c0_11] : memref<24x72xbf16, #tpu.memory_space<vmem>>, vector<16x72xbf16>
    %c16 = arith.constant 16 : index
    %c0_12 = arith.constant 0 : index
    %52 = vector.load %arg1[%c16, %c0_12] : memref<24x72xbf16, #tpu.memory_space<vmem>>, vector<8x72xbf16>
    %c0_13 = arith.constant 0 : index
    %c0_14 = arith.constant 0 : index
    %53 = vector.load %arg2[%c0_13, %c0_14] : memref<8x5xf32, #tpu.memory_space<vmem>>, vector<8x5xf32>
    %54 = vector.extract_strided_slice %53 {offsets = [0, 0], sizes = [8, 1], strides = [1, 1]} : vector<8x5xf32> to vector<8x1xf32>
    %55 = vector.extract_strided_slice %53 {offsets = [0, 1], sizes = [8, 1], strides = [1, 1]} : vector<8x5xf32> to vector<8x1xf32>
    %56 = vector.extract_strided_slice %53 {offsets = [0, 2], sizes = [8, 1], strides = [1, 1]} : vector<8x5xf32> to vector<8x1xf32>
    %57 = vector.extract_strided_slice %53 {offsets = [0, 3], sizes = [8, 1], strides = [1, 1]} : vector<8x5xf32> to vector<8x1xf32>
    %58 = vector.extract_strided_slice %53 {offsets = [0, 4], sizes = [8, 1], strides = [1, 1]} : vector<8x5xf32> to vector<8x1xf32>
    %c0_15 = arith.constant 0 : index
    %c0_16 = arith.constant 0 : index
    %c0_17 = arith.constant 0 : index
    %59 = vector.load %arg0[%c0_15, %c0_16, %c0_17] : memref<2x8x256xf32, #tpu.memory_space<vmem>>, vector<1x8x256xf32>
    %60 = vector.shape_cast %59 : vector<1x8x256xf32> to vector<8x256xf32>
    %c1 = arith.constant 1 : index
    %c0_18 = arith.constant 0 : index
    %c0_19 = arith.constant 0 : index
    %61 = vector.load %arg0[%c1, %c0_18, %c0_19] : memref<2x8x256xf32, #tpu.memory_space<vmem>>, vector<1x8x256xf32>
    %62 = vector.shape_cast %61 : vector<1x8x256xf32> to vector<8x256xf32>
    %63 = tpu.concatenate %60, %62 in 1 : vector<8x256xf32>, vector<8x256xf32> -> vector<8x512xf32>
    %cst = arith.constant dense<0.000000e+00> : vector<8xf32>
    %64 = vector.multi_reduction <add>, %63, %cst [1] : vector<8x512xf32> to vector<8xf32>
    %65 = vector.shape_cast %64 : vector<8xf32> to vector<8x1xf32>
    %cst_20 = arith.constant 0.001953125 : f32
    %66 = vector.broadcast %cst_20 : f32 to vector<8x1xf32>
    %67 = arith.mulf %65, %66 : vector<8x1xf32>
    %68 = arith.mulf %63, %63 : vector<8x512xf32>
    %cst_21 = arith.constant dense<0.000000e+00> : vector<8xf32>
    %69 = vector.multi_reduction <add>, %68, %cst_21 [1] : vector<8x512xf32> to vector<8xf32>
    %70 = vector.shape_cast %69 : vector<8xf32> to vector<8x1xf32>
    %cst_22 = arith.constant 0.001953125 : f32
    %71 = vector.broadcast %cst_22 : f32 to vector<8x1xf32>
    %72 = arith.mulf %70, %71 : vector<8x1xf32>
    %73 = arith.mulf %67, %67 : vector<8x1xf32>
    %74 = arith.subf %72, %73 : vector<8x1xf32>
    %cst_23 = arith.constant 9.99999974E-6 : f32
    %75 = vector.broadcast %cst_23 : f32 to vector<8x1xf32>
    %76 = arith.addf %74, %75 : vector<8x1xf32>
    %77 = math.rsqrt %76 : vector<8x1xf32>
    %78 = arith.mulf %54, %77 : vector<8x1xf32>
    %79 = vector.broadcast %78 : vector<8x1xf32> to vector<8x512xf32>
    %80 = arith.mulf %63, %79 : vector<8x512xf32>
    %81 = arith.mulf %67, %78 : vector<8x1xf32>
    %82 = arith.subf %55, %81 : vector<8x1xf32>
    %83 = vector.broadcast %82 : vector<8x1xf32> to vector<8x512xf32>
    %84 = arith.addf %80, %83 : vector<8x512xf32>
    %cst_24 = arith.constant 0.000000e+00 : f32
    %85 = vector.broadcast %cst_24 : f32 to vector<8x512xf32>
    %86 = arith.maximumf %84, %85 : vector<8x512xf32>
    %c17_i32 = arith.constant 17 : i32
    %87 = tpu.dynamic_rotate %86 by %c17_i32 dim 1 : vector<8x512xf32>, i32 -> vector<8x512xf32>
    %88 = vector.broadcast %13 : vector<1x512xf32> to vector<8x512xf32>
    %89 = arith.mulf %87, %88 : vector<8x512xf32>
    %c16_i32 = arith.constant 16 : i32
    %90 = tpu.dynamic_rotate %86 by %c16_i32 dim 1 : vector<8x512xf32>, i32 -> vector<8x512xf32>
    %91 = vector.broadcast %17 : vector<1x512xf32> to vector<8x512xf32>
    %92 = arith.mulf %90, %91 : vector<8x512xf32>
    %c15_i32_25 = arith.constant 15 : i32
    %93 = tpu.dynamic_rotate %86 by %c15_i32_25 dim 1 : vector<8x512xf32>, i32 -> vector<8x512xf32>
    %94 = vector.broadcast %24 : vector<1x512xf32> to vector<8x512xf32>
    %95 = arith.mulf %93, %94 : vector<8x512xf32>
    %c1_i32_26 = arith.constant 1 : i32
    %96 = tpu.dynamic_rotate %86 by %c1_i32_26 dim 1 : vector<8x512xf32>, i32 -> vector<8x512xf32>
    %97 = vector.broadcast %28 : vector<1x512xf32> to vector<8x512xf32>
    %98 = arith.mulf %96, %97 : vector<8x512xf32>
    %c511_i32 = arith.constant 511 : i32
    %99 = tpu.dynamic_rotate %86 by %c511_i32 dim 1 : vector<8x512xf32>, i32 -> vector<8x512xf32>
    %100 = vector.broadcast %32 : vector<1x512xf32> to vector<8x512xf32>
    %101 = arith.mulf %99, %100 : vector<8x512xf32>
    %c497_i32 = arith.constant 497 : i32
    %102 = tpu.dynamic_rotate %86 by %c497_i32 dim 1 : vector<8x512xf32>, i32 -> vector<8x512xf32>
    %103 = vector.broadcast %39 : vector<1x512xf32> to vector<8x512xf32>
    %104 = arith.mulf %102, %103 : vector<8x512xf32>
    %c496_i32 = arith.constant 496 : i32
    %105 = tpu.dynamic_rotate %86 by %c496_i32 dim 1 : vector<8x512xf32>, i32 -> vector<8x512xf32>
    %106 = vector.broadcast %43 : vector<1x512xf32> to vector<8x512xf32>
    %107 = arith.mulf %105, %106 : vector<8x512xf32>
    %c495_i32 = arith.constant 495 : i32
    %108 = tpu.dynamic_rotate %86 by %c495_i32 dim 1 : vector<8x512xf32>, i32 -> vector<8x512xf32>
    %109 = vector.broadcast %50 : vector<1x512xf32> to vector<8x512xf32>
    %110 = arith.mulf %108, %109 : vector<8x512xf32>
    %111 = tpu.concatenate %89, %92, %95, %98, %86, %101, %104, %107, %110 in 0 : vector<8x512xf32>, vector<8x512xf32>, vector<8x512xf32>, vector<8x512xf32>, vector<8x512xf32>, vector<8x512xf32>, vector<8x512xf32>, vector<8x512xf32>, vector<8x512xf32> -> vector<72x512xf32>
    %112 = arith.truncf %111 : vector<72x512xf32> to vector<72x512xbf16>
    %cst_27 = arith.constant dense<0.000000e+00> : vector<16x512xf32>
    %113 = tpu.matmul %51, %112, %cst_27 {dimension_numbers = #tpu.dot_dimension_numbers<[1], [0], [0], [1], [0, 0, 1, 1], [], []>} : vector<16x72xbf16>, vector<72x512xbf16>, vector<16x512xf32> -> vector<16x512xf32>
    %114 = vector.extract_strided_slice %113 {offsets = [0, 0], sizes = [8, 512], strides = [1, 1]} : vector<16x512xf32> to vector<8x512xf32>
    %115 = vector.extract_strided_slice %113 {offsets = [8, 0], sizes = [8, 512], strides = [1, 1]} : vector<16x512xf32> to vector<8x512xf32>
    %cst_28 = arith.constant dense<0.000000e+00> : vector<8xf32>
    %116 = vector.multi_reduction <add>, %114, %cst_28 [1] : vector<8x512xf32> to vector<8xf32>
    %117 = vector.shape_cast %116 : vector<8xf32> to vector<8x1xf32>
    %cst_29 = arith.constant 0.001953125 : f32
    %118 = vector.broadcast %cst_29 : f32 to vector<8x1xf32>
    %119 = arith.mulf %117, %118 : vector<8x1xf32>
    %120 = arith.mulf %114, %114 : vector<8x512xf32>
    %cst_30 = arith.constant dense<0.000000e+00> : vector<8xf32>
    %121 = vector.multi_reduction <add>, %120, %cst_30 [1] : vector<8x512xf32> to vector<8xf32>
    %122 = vector.shape_cast %121 : vector<8xf32> to vector<8x1xf32>
    %cst_31 = arith.constant 0.001953125 : f32
    %123 = vector.broadcast %cst_31 : f32 to vector<8x1xf32>
    %124 = arith.mulf %122, %123 : vector<8x1xf32>
    %125 = arith.mulf %119, %119 : vector<8x1xf32>
    %126 = arith.subf %124, %125 : vector<8x1xf32>
    %cst_32 = arith.constant 9.99999974E-6 : f32
    %127 = vector.broadcast %cst_32 : f32 to vector<8x1xf32>
    %128 = arith.addf %126, %127 : vector<8x1xf32>
    %129 = math.rsqrt %128 : vector<8x1xf32>
    %130 = arith.mulf %56, %129 : vector<8x1xf32>
    %131 = vector.broadcast %130 : vector<8x1xf32> to vector<8x512xf32>
    %132 = arith.mulf %114, %131 : vector<8x512xf32>
    %133 = arith.mulf %119, %130 : vector<8x1xf32>
    %134 = arith.subf %57, %133 : vector<8x1xf32>
    %135 = vector.broadcast %134 : vector<8x1xf32> to vector<8x512xf32>
    %136 = arith.addf %132, %135 : vector<8x512xf32>
    %cst_33 = arith.constant 0.000000e+00 : f32
    %137 = vector.broadcast %cst_33 : f32 to vector<8x512xf32>
    %138 = arith.maximumf %136, %137 : vector<8x512xf32>
    %c17_i32_34 = arith.constant 17 : i32
    %139 = tpu.dynamic_rotate %138 by %c17_i32_34 dim 1 : vector<8x512xf32>, i32 -> vector<8x512xf32>
    %140 = vector.broadcast %13 : vector<1x512xf32> to vector<8x512xf32>
    %141 = arith.mulf %139, %140 : vector<8x512xf32>
    %c16_i32_35 = arith.constant 16 : i32
    %142 = tpu.dynamic_rotate %138 by %c16_i32_35 dim 1 : vector<8x512xf32>, i32 -> vector<8x512xf32>
    %143 = vector.broadcast %17 : vector<1x512xf32> to vector<8x512xf32>
    %144 = arith.mulf %142, %143 : vector<8x512xf32>
    %c15_i32_36 = arith.constant 15 : i32
    %145 = tpu.dynamic_rotate %138 by %c15_i32_36 dim 1 : vector<8x512xf32>, i32 -> vector<8x512xf32>
    %146 = vector.broadcast %24 : vector<1x512xf32> to vector<8x512xf32>
    %147 = arith.mulf %145, %146 : vector<8x512xf32>
    %c1_i32_37 = arith.constant 1 : i32
    %148 = tpu.dynamic_rotate %138 by %c1_i32_37 dim 1 : vector<8x512xf32>, i32 -> vector<8x512xf32>
    %149 = vector.broadcast %28 : vector<1x512xf32> to vector<8x512xf32>
    %150 = arith.mulf %148, %149 : vector<8x512xf32>
    %c511_i32_38 = arith.constant 511 : i32
    %151 = tpu.dynamic_rotate %138 by %c511_i32_38 dim 1 : vector<8x512xf32>, i32 -> vector<8x512xf32>
    %152 = vector.broadcast %32 : vector<1x512xf32> to vector<8x512xf32>
    %153 = arith.mulf %151, %152 : vector<8x512xf32>
    %c497_i32_39 = arith.constant 497 : i32
    %154 = tpu.dynamic_rotate %138 by %c497_i32_39 dim 1 : vector<8x512xf32>, i32 -> vector<8x512xf32>
    %155 = vector.broadcast %39 : vector<1x512xf32> to vector<8x512xf32>
    %156 = arith.mulf %154, %155 : vector<8x512xf32>
    %c496_i32_40 = arith.constant 496 : i32
    %157 = tpu.dynamic_rotate %138 by %c496_i32_40 dim 1 : vector<8x512xf32>, i32 -> vector<8x512xf32>
    %158 = vector.broadcast %43 : vector<1x512xf32> to vector<8x512xf32>
    %159 = arith.mulf %157, %158 : vector<8x512xf32>
    %c495_i32_41 = arith.constant 495 : i32
    %160 = tpu.dynamic_rotate %138 by %c495_i32_41 dim 1 : vector<8x512xf32>, i32 -> vector<8x512xf32>
    %161 = vector.broadcast %50 : vector<1x512xf32> to vector<8x512xf32>
    %162 = arith.mulf %160, %161 : vector<8x512xf32>
    %163 = tpu.concatenate %141, %144, %147, %150, %138, %153, %156, %159, %162 in 0 : vector<8x512xf32>, vector<8x512xf32>, vector<8x512xf32>, vector<8x512xf32>, vector<8x512xf32>, vector<8x512xf32>, vector<8x512xf32>, vector<8x512xf32>, vector<8x512xf32> -> vector<72x512xf32>
    %164 = arith.truncf %163 : vector<72x512xf32> to vector<72x512xbf16>
    %cst_42 = arith.constant dense<0.000000e+00> : vector<8x512xf32>
    %165 = tpu.matmul %52, %164, %cst_42 {dimension_numbers = #tpu.dot_dimension_numbers<[1], [0], [0], [1], [0, 0, 1, 1], [], []>} : vector<8x72xbf16>, vector<72x512xbf16>, vector<8x512xf32> -> vector<8x512xf32>
    %cst_43 = arith.constant 2.000000e-01 : f32
    %166 = vector.broadcast %cst_43 : f32 to vector<8x512xf32>
    %167 = arith.mulf %165, %166 : vector<8x512xf32>
    %168 = arith.addf %167, %115 : vector<8x512xf32>
    %169 = vector.broadcast %58 : vector<8x1xf32> to vector<8x512xf32>
    %170 = arith.addf %168, %169 : vector<8x512xf32>
    %171 = vector.extract_strided_slice %170 {offsets = [0, 0], sizes = [8, 256], strides = [1, 1]} : vector<8x512xf32> to vector<8x256xf32>
    %c0_44 = arith.constant 0 : index
    %c0_45 = arith.constant 0 : index
    %c0_46 = arith.constant 0 : index
    %172 = vector.load %arg3[%c0_44, %c0_45, %c0_46] : memref<2x8x256xf32, #tpu.memory_space<vmem>>, vector<1x8x256xf32>
    %173 = vector.shape_cast %172 : vector<1x8x256xf32> to vector<8x256xf32>
    %174 = vector.shape_cast %171 : vector<8x256xf32> to vector<1x8x256xf32>
    tpu.vector_store %arg3[%c0_44, %c0_45, %c0_46], %174 {strides = array<i32>} : memref<2x8x256xf32, #tpu.memory_space<vmem>>, vector<1x8x256xf32>,
    %175 = vector.extract_strided_slice %170 {offsets = [0, 256], sizes = [8, 256], strides = [1, 1]} : vector<8x512xf32> to vector<8x256xf32>
    %c1_47 = arith.constant 1 : index
    %c0_48 = arith.constant 0 : index
    %c0_49 = arith.constant 0 : index
    %176 = vector.load %arg3[%c1_47, %c0_48, %c0_49] : memref<2x8x256xf32, #tpu.memory_space<vmem>>, vector<1x8x256xf32>
    %177 = vector.shape_cast %176 : vector<1x8x256xf32> to vector<8x256xf32>
    %178 = vector.shape_cast %175 : vector<8x256xf32> to vector<1x8x256xf32>
    tpu.vector_store %arg3[%c1_47, %c0_48, %c0_49], %178 {strides = array<i32>} : memref<2x8x256xf32, #tpu.memory_space<vmem>>, vector<1x8x256xf32>,
    return
  }
}

</mosaic_0001>

<llo_original>
// kernel: wide_block_forward.1
$region0: #{wide_block_forward.1}
  #allocation0 [shape = 'u32[]', space=smem, size = 0x4, offset = 0x4, fixed_abs, tag = 'smem constant byte address 0x4 - core index']
  #allocation1 [shape = 'u32[144,128]{1,0:T(1,128)}', space=vmem, size = 0x12000, scoped, tag = 'internal scratch']
  %s0 = inlined_call_operand.vmem [shape: f32[2,8,256], index: 0, kind: input, shape index: {}]
  %s1 = inlined_call_operand.vmem [shape: bf16[24,72], index: 1, kind: input, shape index: {}]
  %s2 = inlined_call_operand.vmem [shape: f32[8,5], index: 2, kind: input, shape index: {}]
  %s3 = inlined_call_operand.vmem [shape: f32[2,8,256], index: 3, kind: output, shape index: {}]
  %s4 = sld [smem:[#allocation0]]
  $region22: #{wide_block_forward.1} parent=0
    _
  %s6 = ssub.s32 1, %s4
  %s7 = scalar_select 0, %s6, %s4
  // Predicated region
  $region2: #{wide_block_forward.1} parent=0 // pred_check
    _
  $region3: #{wide_block_forward.1} parent=0 // pred_check_branch
    %9 = sbr.rel (0) target = $region5
  $region4: #{wide_block_forward.1} parent=0 // pred_region
    _
  $region5: #{wide_block_forward.1} parent=0 // pred_fallthru
    _
  // Predicated region
  $region6: #{wide_block_forward.1} parent=0 // pred_check
    _
  $region7: #{wide_block_forward.1} parent=0 // pred_check_branch
    %11 = sbr.rel (0) target = $region9
  $region8: #{wide_block_forward.1} parent=0 // pred_region
    _
  $region9: #{wide_block_forward.1} parent=0 // pred_fallthru
    _
  // Predicated region
  $region10: #{wide_block_forward.1} parent=0 // pred_check
    _
  $region11: #{wide_block_forward.1} parent=0 // pred_check_branch
    %13 = sbr.rel (0) target = $region13
  $region12: #{wide_block_forward.1} parent=0 // pred_region
    _
  $region13: #{wide_block_forward.1} parent=0 // pred_fallthru
    _
  %v15 = vlaneseq
  %v16 = vand.u32 %v15, 127
  %v17 = vadd.s32 %v16, 128
  %v18 = vadd.s32 %v16, 256
  %v19 = vadd.s32 %v16, 384
  %v20 = vand.u32 %v16, 15
  %v21 = vand.u32 %v17, 15
  %v22 = vand.u32 %v18, 15
  %v23 = vand.u32 %v19, 15
  %v24 = vshra.s32 %v16, 4
  %v25 = vshra.s32 %v17, 4
  %v26 = vshra.s32 %v18, 4
  %v27 = vshra.s32 %v19, 4
  %v28 = vand.u32 %v24, 15
  %v29 = vand.u32 %v25, 15
  %v30 = vand.u32 %v26, 15
  %v31 = vand.u32 %v27, 15
  %vm32 = vcmp.ge.s32.totalorder %v28, 1
  %vm33 = vcmp.ge.s32.totalorder %v29, 1
  %vm34 = vcmp.ge.s32.totalorder %v30, 1
  %vm35 = vcmp.ge.s32.totalorder %v31, 1
  %vm36 = vcmp.ge.s32.totalorder %v20, 1
  %vm37 = vcmp.ge.s32.totalorder %v21, 1
  %vm38 = vcmp.ge.s32.totalorder %v22, 1
  %vm39 = vcmp.ge.s32.totalorder %v23, 1
  %vm40 = vmand %vm32, %vm36
  %vm41 = vmand %vm33, %vm37
  %vm42 = vmand %vm34, %vm38
  %vm43 = vmand %vm35, %vm39
  %v44 = vsel %vm40, 1, 0
  %v45 = vsel %vm41, 1, 0
  %v46 = vsel %vm42, 1, 0
  %v47 = vsel %vm43, 1, 0
  %v48 = vcvt.s32.f32 %v44
  %v49 = vcvt.s32.f32 %v45
  %v50 = vcvt.s32.f32 %v46
  %v51 = vcvt.s32.f32 %v47
  %v52 = vsel %vm32, 1, 0
  %v53 = vsel %vm33, 1, 0
  %v54 = vsel %vm34, 1, 0
  %v55 = vsel %vm35, 1, 0
  %v56 = vcvt.s32.f32 %v52
  %v57 = vcvt.s32.f32 %v53
  %v58 = vcvt.s32.f32 %v54
  %v59 = vcvt.s32.f32 %v55
  %vm60 = vcmp.le.s32.totalorder %v20, 14
  %vm61 = vcmp.le.s32.totalorder %v21, 14
  %vm62 = vcmp.le.s32.totalorder %v22, 14
  %vm63 = vcmp.le.s32.totalorder %v23, 14
  %vm64 = vmand %vm32, %vm60
  %vm65 = vmand %vm33, %vm61
  %vm66 = vmand %vm34, %vm62
  %vm67 = vmand %vm35, %vm63
  %v68 = vsel %vm64, 1, 0
  %v69 = vsel %vm65, 1, 0
  %v70 = vsel %vm66, 1, 0
  %v71 = vsel %vm67, 1, 0
  %v72 = vcvt.s32.f32 %v68
  %v73 = vcvt.s32.f32 %v69
  %v74 = vcvt.s32.f32 %v70
  %v75 = vcvt.s32.f32 %v71
  %v76 = vsel %vm36, 1, 0
  %v77 = vsel %vm37, 1, 0
  %v78 = vsel %vm38, 1, 0
  %v79 = vsel %vm39, 1, 0
  %v80 = vcvt.s32.f32 %v76
  %v81 = vcvt.s32.f32 %v77
  %v82 = vcvt.s32.f32 %v78
  %v83 = vcvt.s32.f32 %v79
  %v84 = vsel %vm60, 1, 0
  %v85 = vsel %vm61, 1, 0
  %v86 = vsel %vm62, 1, 0
  %v87 = vsel %vm63, 1, 0
  %v88 = vcvt.s32.f32 %v84
  %v89 = vcvt.s32.f32 %v85
  %v90 = vcvt.s32.f32 %v86
  %v91 = vcvt.s32.f32 %v87
  %vm92 = vcmp.le.s32.totalorder %v28, 14
  %vm93 = vcmp.le.s32.totalorder %v29, 14
  %vm94 = vcmp.le.s32.totalorder %v30, 14
  %vm95 = vcmp.le.s32.totalorder %v31, 14
  %vm96 = vmand %vm92, %vm36
  %vm97 = vmand %vm93, %vm37
  %vm98 = vmand %vm94, %vm38
  %vm99 = vmand %vm95, %vm39
  %v100 = vsel %vm96, 1, 0
  %v101 = vsel %vm97, 1, 0
  %v102 = vsel %vm98, 1, 0
  %v103 = vsel %vm99, 1, 0
  %v104 = vcvt.s32.f32 %v100
  %v105 = vcvt.s32.f32 %v101
  %v106 = vcvt.s32.f32 %v102
  %v107 = vcvt.s32.f32 %v103
  %v108 = vsel %vm92, 1, 0
  %v109 = vsel %vm93, 1, 0
  %v110 = vsel %vm94, 1, 0
  %v111 = vsel %vm95, 1, 0
  %v112 = vcvt.s32.f32 %v108
  %v113 = vcvt.s32.f32 %v109
  %v114 = vcvt.s32.f32 %v110
  %v115 = vcvt.s32.f32 %v111
  %vm116 = vmand %vm92, %vm60
  %vm117 = vmand %vm93, %vm61
  %vm118 = vmand %vm94, %vm62
  %vm119 = vmand %vm95, %vm63
  %v120 = vsel %vm116, 1, 0
  %v121 = vsel %vm117, 1, 0
  %v122 = vsel %vm118, 1, 0
  %v123 = vsel %vm119, 1, 0
  %v124 = vcvt.s32.f32 %v120
  %v125 = vcvt.s32.f32 %v121
  %v126 = vcvt.s32.f32 %v122
  %v127 = vcvt.s32.f32 %v123
  %v128 = vld [vmem:[%s1] sm:$0xf]
  %v129 = vld [vmem:[%s1 + $0x4] sm:$0xf]
  %v130 = vld [vmem:[%s1 + $0x8] sm:$0xf]
  %v131 = vld [vmem:[%s2] sm:$0xff]
  %v132 = vld [vmem:[%s0] sm:$0xff]
  %v133 = vld [vmem:[%s0 + $0x8] sm:$0xff]
  %s134 = scalar_lea.vmem %s0, 16
  %v135 = vld [vmem:[%s134] sm:$0xff]
  %v136 = vld [vmem:[%s134 + $0x8] sm:$0xff]
  %v137 = vadd.f32 %v132, %v133
  %v138 = vadd.f32 %v137, %v135
  %v139 = vadd.f32 %v138, %v136
  %140 = vadd.xlane.f32.xlu0 %v139
  %v141 = vpop.xlane.xlu0 %140
  %v142 = vmul.f32 %v141, 0.001953125
  %v143 = vmul.f32 %v132, %v132
  %v144 = vmul.f32 %v133, %v133
  %v145 = vmul.f32 %v135, %v135
  %v146 = vmul.f32 %v136, %v136
  %v147 = vadd.f32 %v143, %v144
  %v148 = vadd.f32 %v147, %v145
  %v149 = vadd.f32 %v148, %v146
  %150 = vadd.xlane.f32.xlu0 %v149
  %v151 = vpop.xlane.xlu0 %150
  %v152 = vmul.f32 %v151, 0.001953125
  %v153 = vmul.f32 %v142, %v142
  %v154 = vsub.f32 %v152, %v153
  %v155 = vadd.f32 %v154, 1e-05
  %v156 = vrsqrt.pop %v155
  %v157 = vmul.f32 %v131, %v156
  %159 = vset.pattern.permute.xlu0 0
  %160 = vperm.xlu0 %159, %v157
  %v161 = vpop.permute.xlu0 %160
  %v163 = vmul.f32 %v132, %v161
  %v164 = vmul.f32 %v133, %v161
  %v165 = vmul.f32 %v135, %v161
  %v166 = vmul.f32 %v136, %v161
  %v167 = vmul.f32 %v142, %v157
  %169 = vrot.lane.b32.xlu0 %v167, 1
  %v170 = vpop.permute.xlu0 %169
  %v172 = vsub.f32 %v131, %v170
  %174 = vset.pattern.permute.xlu0 1
  %175 = vperm.xlu0 %174, %v172
  %v176 = vpop.permute.xlu0 %175
  %v178 = vadd.f32 %v163, %v176
  %v179 = vadd.f32 %v164, %v176
  %v180 = vadd.f32 %v165, %v176
  %v181 = vadd.f32 %v166, %v176
  %v182 = vmax.f32 %v178, 0.0
  %v183 = vmax.f32 %v179, 0.0
  %v184 = vmax.f32 %v180, 0.0
  %v185 = vmax.f32 %v181, 0.0
  %186 = vrot.lane.b32.xlu0 %v182, 17
  %v187 = vpop.permute.xlu0 %186
  %188 = vrot.lane.b32.xlu0 %v183, 17
  %v189 = vpop.permute.xlu0 %188
  %190 = vrot.lane.b32.xlu0 %v184, 17
  %v191 = vpop.permute.xlu0 %190
  %192 = vrot.lane.b32.xlu0 %v185, 17
  %v193 = vpop.permute.xlu0 %192
  %vm194 = vcmp.lt.s32.totalorder %v16, 17
  %v195 = vsel %vm194, %v191, %v193
  %v196 = vsel %vm194, %v189, %v191
  %v197 = vsel %vm194, %v187, %v189
  %v198 = vsel %vm194, %v193, %v187
  %v199 = vmul.f32 %v198, %v48
  %v200 = vmul.f32 %v197, %v49
  %v201 = vmul.f32 %v196, %v50
  %v202 = vmul.f32 %v195, %v51
  %203 = vrot.lane.b32.xlu0 %v182, 16
  %v204 = vpop.permute.xlu0 %203
  %205 = vrot.lane.b32.xlu0 %v183, 16
  %v206 = vpop.permute.xlu0 %205
  %207 = vrot.lane.b32.xlu0 %v184, 16
  %v208 = vpop.permute.xlu0 %207
  %209 = vrot.lane.b32.xlu0 %v185, 16
  %v210 = vpop.permute.xlu0 %209
  %vm211 = vcmp.lt.s32.totalorder %v16, 16
  %v212 = vsel %vm211, %v208, %v210
  %v213 = vsel %vm211, %v206, %v208
  %v214 = vsel %vm211, %v204, %v206
  %v215 = vsel %vm211, %v210, %v204
  %v216 = vmul.f32 %v215, %v56
  %v217 = vmul.f32 %v214, %v57
  %v218 = vmul.f32 %v213, %v58
  %v219 = vmul.f32 %v212, %v59
  %220 = vrot.lane.b32.xlu0 %v182, 15
  %v221 = vpop.permute.xlu0 %220
  %222 = vrot.lane.b32.xlu0 %v183, 15
  %v223 = vpop.permute.xlu0 %222
  %224 = vrot.lane.b32.xlu0 %v184, 15
  %v225 = vpop.permute.xlu0 %224
  %226 = vrot.lane.b32.xlu0 %v185, 15
  %v227 = vpop.permute.xlu0 %226
  %vm228 = vcmp.lt.s32.totalorder %v16, 15
  %v229 = vsel %vm228, %v225, %v227
  %v230 = vsel %vm228, %v223, %v225
  %v231 = vsel %vm228, %v221, %v223
  %v232 = vsel %vm228, %v227, %v221
  %v233 = vmul.f32 %v232, %v72
  %v234 = vmul.f32 %v231, %v73
  %v235 = vmul.f32 %v230, %v74
  %v236 = vmul.f32 %v229, %v75
  %237 = vrot.lane.b32.xlu0 %v182, 1
  %v238 = vpop.permute.xlu0 %237
  %239 = vrot.lane.b32.xlu0 %v183, 1
  %v240 = vpop.permute.xlu0 %239
  %241 = vrot.lane.b32.xlu0 %v184, 1
  %v242 = vpop.permute.xlu0 %241
  %243 = vrot.lane.b32.xlu0 %v185, 1
  %v244 = vpop.permute.xlu0 %243
  %vm245 = vcmp.lt.s32.totalorder %v16, 1
  %v246 = vsel %vm245, %v242, %v244
  %v247 = vsel %vm245, %v240, %v242
  %v248 = vsel %vm245, %v238, %v240
  %v249 = vsel %vm245, %v244, %v238
  %v250 = vmul.f32 %v249, %v80
  %v251 = vmul.f32 %v248, %v81
  %v252 = vmul.f32 %v247, %v82
  %v253 = vmul.f32 %v246, %v83
  %254 = vrot.lane.b32.xlu0 %v182, 127
  %v255 = vpop.permute.xlu0 %254
  %256 = vrot.lane.b32.xlu0 %v183, 127
  %v257 = vpop.permute.xlu0 %256
  %258 = vrot.lane.b32.xlu0 %v184, 127
  %v259 = vpop.permute.xlu0 %258
  %260 = vrot.lane.b32.xlu0 %v185, 127
  %v261 = vpop.permute.xlu0 %260
  %vm262 = vcmp.lt.s32.totalorder %v16, 127
  %v263 = vsel %vm262, %v259, %v261
  %v264 = vsel %vm262, %v257, %v259
  %v265 = vsel %vm262, %v255, %v257
  %v266 = vsel %vm262, %v261, %v255
  %v267 = vmul.f32 %v265, %v88
  %v268 = vmul.f32 %v264, %v89
  %v269 = vmul.f32 %v263, %v90
  %v270 = vmul.f32 %v266, %v91
  %271 = vrot.lane.b32.xlu0 %v182, 113
  %v272 = vpop.permute.xlu0 %271
  %273 = vrot.lane.b32.xlu0 %v183, 113
  %v274 = vpop.permute.xlu0 %273
  %275 = vrot.lane.b32.xlu0 %v184, 113
  %v276 = vpop.permute.xlu0 %275
  %277 = vrot.lane.b32.xlu0 %v185, 113
  %v278 = vpop.permute.xlu0 %277
  %vm279 = vcmp.lt.s32.totalorder %v16, 113
  %v280 = vsel %vm279, %v276, %v278
  %v281 = vsel %vm279, %v274, %v276
  %v282 = vsel %vm279, %v272, %v274
  %v283 = vsel %vm279, %v278, %v272
  %v284 = vmul.f32 %v282, %v104
  %v285 = vmul.f32 %v281, %v105
  %v286 = vmul.f32 %v280, %v106
  %v287 = vmul.f32 %v283, %v107
  %288 = vrot.lane.b32.xlu0 %v182, 112
  %v289 = vpop.permute.xlu0 %288
  %290 = vrot.lane.b32.xlu0 %v183, 112
  %v291 = vpop.permute.xlu0 %290
  %292 = vrot.lane.b32.xlu0 %v184, 112
  %v293 = vpop.permute.xlu0 %292
  %294 = vrot.lane.b32.xlu0 %v185, 112
  %v295 = vpop.permute.xlu0 %294
  %vm296 = vcmp.lt.s32.totalorder %v16, 112
  %v297 = vsel %vm296, %v293, %v295
  %v298 = vsel %vm296, %v291, %v293
  %v299 = vsel %vm296, %v289, %v291
  %v300 = vsel %vm296, %v295, %v289
  %v301 = vmul.f32 %v299, %v112
  %v302 = vmul.f32 %v298, %v113
  %v303 = vmul.f32 %v297, %v114
  %v304 = vmul.f32 %v300, %v115
  %305 = vrot.lane.b32.xlu0 %v182, 111
  %v306 = vpop.permute.xlu0 %305
  %307 = vrot.lane.b32.xlu0 %v183, 111
  %v308 = vpop.permute.xlu0 %307
  %309 = vrot.lane.b32.xlu0 %v184, 111
  %v310 = vpop.permute.xlu0 %309
  %311 = vrot.lane.b32.xlu0 %v185, 111
  %v312 = vpop.permute.xlu0 %311
  %vm313 = vcmp.lt.s32.totalorder %v16, 111
  %v314 = vsel %vm313, %v310, %v312
  %v315 = vsel %vm313, %v308, %v310
  %v316 = vsel %vm313, %v306, %v308
  %v317 = vsel %vm313, %v312, %v306
  %v318 = vmul.f32 %v316, %v124
  %v319 = vmul.f32 %v315, %v125
  %v320 = vmul.f32 %v314, %v126
  %v321 = vmul.f32 %v317, %v127
  %v322 = vpack.c.bf16 %v216, %v199
  %v323 = vpack.c.bf16 %v217, %v200
  %v324 = vpack.c.bf16 %v218, %v201
  %v325 = vpack.c.bf16 %v219, %v202
  %v326 = vpack.c.bf16 %v250, %v233
  %v327 = vpack.c.bf16 %v251, %v234
  %v328 = vpack.c.bf16 %v252, %v235
  %v329 = vpack.c.bf16 %v253, %v236
  %v330 = vpack.c.bf16 %v267, %v182
  %v331 = vpack.c.bf16 %v268, %v183
  %v332 = vpack.c.bf16 %v269, %v184
  %v333 = vpack.c.bf16 %v270, %v185
  %v334 = vpack.c.bf16 %v301, %v284
  %v335 = vpack.c.bf16 %v302, %v285
  %v336 = vpack.c.bf16 %v303, %v286
  %v337 = vpack.c.bf16 %v304, %v287
  %v338 = vpack.c.bf16 %v318, %v318
  %v339 = vpack.c.bf16 %v319, %v319
  %v340 = vpack.c.bf16 %v320, %v320
  %v341 = vpack.c.bf16 %v321, %v321
  %v344 = vunpack.c.l.b16 %v128
  %v345 = vunpack.c.l.b16 %v129
  %v346 = vpack.c.b16 %v345, %v344
  %vm347 = vcmask 588800
  %v349 = vsel %vm347, %v346, 0
  %vm351 = vcmask 1043456
  %v353 = vsel %vm351, %v338, 0
  %v356 = vsel %vm351, %v339, 0
  %v359 = vsel %vm351, %v340, 0
  %v362 = vsel %vm351, %v341, 0
  %364 = vmatprep.subr.bf16.mxu0 0
  %365 = vmatpush1.bf16.msra.mxu0 0
  %366 = vmatprep.subr.bf16.mxu0 0
  %367 = vmatpush1.bf16.msra.mxu0 0
  %368 = vmatprep.subr.bf16.mxu0 0
  %369 = vmatpush1.bf16.msra.mxu0 0
  %370 = vmatprep.subr.bf16.mxu0 %v356
  %371 = vmatpush1.bf16.msra.mxu0 %v353
  %372 = vmatprep.subr.bf16.mxu0 %v335
  %373 = vmatpush1.bf16.msra.mxu0 %v334
  %374 = vmatprep.subr.bf16.mxu0 %v331
  %375 = vmatpush1.bf16.msra.mxu0 %v330
  %376 = vmatprep.subr.bf16.mxu0 %v327
  %377 = vmatpush1.bf16.msra.mxu0 %v326
  %378 = vmatprep.subr.bf16.mxu0 %v323
  %379 = vmatpush1.bf16.msra.mxu0 %v322
  %380 = vmatprep.subr.bf16.mxu0 0
  %381 = vmatpush2.bf16.msra.mxu0 0
  %382 = vmatprep.subr.bf16.mxu0 0
  %383 = vmatpush2.bf16.msra.mxu0 0
  %384 = vmatprep.subr.bf16.mxu0 0
  %385 = vmatpush2.bf16.msra.mxu0 0
  %386 = vmatprep.subr.bf16.mxu0 0
  %387 = vmatpush2.bf16.msra.mxu0 0
  %388 = vmatprep.subr.bf16.mxu0 0
  %389 = vmatpush2.bf16.msra.mxu0 0
  %390 = vmatprep.subr.bf16.mxu0 0
  %391 = vmatpush2.bf16.msra.mxu0 0
  %392 = vmatprep.subr.bf16.mxu0 0
  %393 = vmatpush2.bf16.msra.mxu0 0
  %394 = vmatprep.subr.bf16.mxu0 0
  %395 = vmatpush2.bf16.msra.mxu0 0
  %396 = vmatprep.mubr.bf16.mxu0 0
  %397 = vmatmul.mubr.bf16.gmra.mxu0 %v349
  %v398 = vpop.f32.mrf.mxu0
  %v399 = vadd.f32 0.0, %v398
  %v400 = vpop.f32.mrf.mxu0
  %v401 = vadd.f32 0.0, %v400
  %v402 = vpop.f32.mrf.mxu0
  %v403 = vadd.f32 0.0, %v402
  %v404 = vpop.f32.mrf.mxu0
  %v405 = vadd.f32 0.0, %v404
  %406 = vdwg.mxu0
  %407 = vmatprep.subr.bf16.mxu0 0
  %408 = vmatpush1.bf16.msra.mxu0 0
  %409 = vmatprep.subr.bf16.mxu0 0
  %410 = vmatpush1.bf16.msra.mxu0 0
  %411 = vmatprep.subr.bf16.mxu0 0
  %412 = vmatpush1.bf16.msra.mxu0 0
  %413 = vmatprep.subr.bf16.mxu0 %v362
  %414 = vmatpush1.bf16.msra.mxu0 %v359
  %415 = vmatprep.subr.bf16.mxu0 %v337
  %416 = vmatpush1.bf16.msra.mxu0 %v336
  %417 = vmatprep.subr.bf16.mxu0 %v333
  %418 = vmatpush1.bf16.msra.mxu0 %v332
  %419 = vmatprep.subr.bf16.mxu0 %v329
  %420 = vmatpush1.bf16.msra.mxu0 %v328
  %421 = vmatprep.subr.bf16.mxu0 %v325
  %422 = vmatpush1.bf16.msra.mxu0 %v324
  %423 = vmatprep.subr.bf16.mxu0 0
  %424 = vmatpush2.bf16.msra.mxu0 0
  %425 = vmatprep.subr.bf16.mxu0 0
  %426 = vmatpush2.bf16.msra.mxu0 0
  %427 = vmatprep.subr.bf16.mxu0 0
  %428 = vmatpush2.bf16.msra.mxu0 0
  %429 = vmatprep.subr.bf16.mxu0 0
  %430 = vmatpush2.bf16.msra.mxu0 0
  %431 = vmatprep.subr.bf16.mxu0 0
  %432 = vmatpush2.bf16.msra.mxu0 0
  %433 = vmatprep.subr.bf16.mxu0 0
  %434 = vmatpush2.bf16.msra.mxu0 0
  %435 = vmatprep.subr.bf16.mxu0 0
  %436 = vmatpush2.bf16.msra.mxu0 0
  %437 = vmatprep.subr.bf16.mxu0 0
  %438 = vmatpush2.bf16.msra.mxu0 0
  %439 = vmatprep.mubr.bf16.mxu0 0
  %440 = vmatmul.mubr.bf16.gmra.mxu0 %v349
  %v441 = vpop.f32.mrf.mxu0
  %v442 = vadd.f32 0.0, %v441
  %v443 = vpop.f32.mrf.mxu0
  %v444 = vadd.f32 0.0, %v443
  %v445 = vpop.f32.mrf.mxu0
  %v446 = vadd.f32 0.0, %v445
  %v447 = vpop.f32.mrf.mxu0
  %v448 = vadd.f32 0.0, %v447
  %449 = vdwg.mxu0
  %v450 = vadd.f32 %v399, %v401
  %v451 = vadd.f32 %v450, %v442
  %v452 = vadd.f32 %v451, %v444
  %453 = vadd.xlane.f32.xlu0 %v452
  %v454 = vpop.xlane.xlu0 %453
  %v455 = vmul.f32 %v454, 0.001953125
  %v456 = vmul.f32 %v399, %v399
  %v457 = vmul.f32 %v401, %v401
  %v458 = vmul.f32 %v442, %v442
  %v459 = vmul.f32 %v444, %v444
  %v460 = vadd.f32 %v456, %v457
  %v461 = vadd.f32 %v460, %v458
  %v462 = vadd.f32 %v461, %v459
  %463 = vadd.xlane.f32.xlu0 %v462
  %v464 = vpop.xlane.xlu0 %463
  %v465 = vmul.f32 %v464, 0.001953125
  %v466 = vmul.f32 %v455, %v455
  %v467 = vsub.f32 %v465, %v466
  %v468 = vadd.f32 %v467, 1e-05
  %v469 = vrsqrt.pop %v468
  %v470 = vmul.f32 %v131, %v469
  %472 = vset.pattern.permute.xlu0 2
  %473 = vperm.xlu0 %472, %v470
  %v474 = vpop.permute.xlu0 %473
  %v476 = vmul.f32 %v399, %v474
  %v477 = vmul.f32 %v401, %v474
  %v478 = vmul.f32 %v442, %v474
  %v479 = vmul.f32 %v444, %v474
  %v480 = vmul.f32 %v455, %v470
  %482 = vrot.lane.b32.xlu0 %v480, 1
  %v483 = vpop.permute.xlu0 %482
  %v485 = vsub.f32 %v131, %v483
  %487 = vset.pattern.permute.xlu0 3
  %488 = vperm.xlu0 %487, %v485
  %v489 = vpop.permute.xlu0 %488
  %v491 = vadd.f32 %v476, %v489
  %v492 = vadd.f32 %v477, %v489
  %v493 = vadd.f32 %v478, %v489
  %v494 = vadd.f32 %v479, %v489
  %v495 = vmax.f32 %v491, 0.0
  %v496 = vmax.f32 %v492, 0.0
  %v497 = vmax.f32 %v493, 0.0
  %v498 = vmax.f32 %v494, 0.0
  %499 = vrot.lane.b32.xlu0 %v495, 17
  %v500 = vpop.permute.xlu0 %499
  %501 = vrot.lane.b32.xlu0 %v496, 17
  %v502 = vpop.permute.xlu0 %501
  %503 = vrot.lane.b32.xlu0 %v497, 17
  %v504 = vpop.permute.xlu0 %503
  %505 = vrot.lane.b32.xlu0 %v498, 17
  %v506 = vpop.permute.xlu0 %505
  %v507 = vsel %vm194, %v504, %v506
  %v508 = vsel %vm194, %v502, %v504
  %v509 = vsel %vm194, %v500, %v502
  %v510 = vsel %vm194, %v506, %v500
  %v511 = vmul.f32 %v510, %v48
  %v512 = vmul.f32 %v509, %v49
  %v513 = vmul.f32 %v508, %v50
  %v514 = vmul.f32 %v507, %v51
  %515 = vrot.lane.b32.xlu0 %v495, 16
  %v516 = vpop.permute.xlu0 %515
  %517 = vrot.lane.b32.xlu0 %v496, 16
  %v518 = vpop.permute.xlu0 %517
  %519 = vrot.lane.b32.xlu0 %v497, 16
  %v520 = vpop.permute.xlu0 %519
  %521 = vrot.lane.b32.xlu0 %v498, 16
  %v522 = vpop.permute.xlu0 %521
  %v523 = vsel %vm211, %v520, %v522
  %v524 = vsel %vm211, %v518, %v520
  %v525 = vsel %vm211, %v516, %v518
  %v526 = vsel %vm211, %v522, %v516
  %v527 = vmul.f32 %v526, %v56
  %v528 = vmul.f32 %v525, %v57
  %v529 = vmul.f32 %v524, %v58
  %v530 = vmul.f32 %v523, %v59
  %531 = vrot.lane.b32.xlu0 %v495, 15
  %v532 = vpop.permute.xlu0 %531
  %533 = vrot.lane.b32.xlu0 %v496, 15
  %v534 = vpop.permute.xlu0 %533
  %535 = vrot.lane.b32.xlu0 %v497, 15
  %v536 = vpop.permute.xlu0 %535
  %537 = vrot.lane.b32.xlu0 %v498, 15
  %v538 = vpop.permute.xlu0 %537
  %v539 = vsel %vm228, %v536, %v538
  %v540 = vsel %vm228, %v534, %v536
  %v541 = vsel %vm228, %v532, %v534
  %v542 = vsel %vm228, %v538, %v532
  %v543 = vmul.f32 %v542, %v72
  %v544 = vmul.f32 %v541, %v73
  %v545 = vmul.f32 %v540, %v74
  %v546 = vmul.f32 %v539, %v75
  %547 = vrot.lane.b32.xlu0 %v495, 1
  %v548 = vpop.permute.xlu0 %547
  %549 = vrot.lane.b32.xlu0 %v496, 1
  %v550 = vpop.permute.xlu0 %549
  %551 = vrot.lane.b32.xlu0 %v497, 1
  %v552 = vpop.permute.xlu0 %551
  %553 = vrot.lane.b32.xlu0 %v498, 1
  %v554 = vpop.permute.xlu0 %553
  %v555 = vsel %vm245, %v552, %v554
  %v556 = vsel %vm245, %v550, %v552
  %v557 = vsel %vm245, %v548, %v550
  %v558 = vsel %vm245, %v554, %v548
  %v559 = vmul.f32 %v558, %v80
  %v560 = vmul.f32 %v557, %v81
  %v561 = vmul.f32 %v556, %v82
  %v562 = vmul.f32 %v555, %v83
  %563 = vrot.lane.b32.xlu0 %v495, 127
  %v564 = vpop.permute.xlu0 %563
  %565 = vrot.lane.b32.xlu0 %v496, 127
  %v566 = vpop.permute.xlu0 %565
  %567 = vrot.lane.b32.xlu0 %v497, 127
  %v568 = vpop.permute.xlu0 %567
  %569 = vrot.lane.b32.xlu0 %v498, 127
  %v570 = vpop.permute.xlu0 %569
  %v571 = vsel %vm262, %v568, %v570
  %v572 = vsel %vm262, %v566, %v568
  %v573 = vsel %vm262, %v564, %v566
  %v574 = vsel %vm262, %v570, %v564
  %v575 = vmul.f32 %v573, %v88
  %v576 = vmul.f32 %v572, %v89
  %v577 = vmul.f32 %v571, %v90
  %v578 = vmul.f32 %v574, %v91
  %579 = vrot.lane.b32.xlu0 %v495, 113
  %v580 = vpop.permute.xlu0 %579
  %581 = vrot.lane.b32.xlu0 %v496, 113
  %v582 = vpop.permute.xlu0 %581
  %583 = vrot.lane.b32.xlu0 %v497, 113
  %v584 = vpop.permute.xlu0 %583
  %585 = vrot.lane.b32.xlu0 %v498, 113
  %v586 = vpop.permute.xlu0 %585
  %v587 = vsel %vm279, %v584, %v586
  %v588 = vsel %vm279, %v582, %v584
  %v589 = vsel %vm279, %v580, %v582
  %v590 = vsel %vm279, %v586, %v580
  %v591 = vmul.f32 %v589, %v104
  %v592 = vmul.f32 %v588, %v105
  %v593 = vmul.f32 %v587, %v106
  %v594 = vmul.f32 %v590, %v107
  %595 = vrot.lane.b32.xlu0 %v495, 112
  %v596 = vpop.permute.xlu0 %595
  %597 = vrot.lane.b32.xlu0 %v496, 112
  %v598 = vpop.permute.xlu0 %597
  %599 = vrot.lane.b32.xlu0 %v497, 112
  %v600 = vpop.permute.xlu0 %599
  %601 = vrot.lane.b32.xlu0 %v498, 112
  %v602 = vpop.permute.xlu0 %601
  %v603 = vsel %vm296, %v600, %v602
  %v604 = vsel %vm296, %v598, %v600
  %v605 = vsel %vm296, %v596, %v598
  %v606 = vsel %vm296, %v602, %v596
  %v607 = vmul.f32 %v605, %v112
  %v608 = vmul.f32 %v604, %v113
  %v609 = vmul.f32 %v603, %v114
  %v610 = vmul.f32 %v606, %v115
  %611 = vrot.lane.b32.xlu0 %v495, 111
  %v612 = vpop.permute.xlu0 %611
  %613 = vrot.lane.b32.xlu0 %v496, 111
  %v614 = vpop.permute.xlu0 %613
  %615 = vrot.lane.b32.xlu0 %v497, 111
  %v616 = vpop.permute.xlu0 %615
  %617 = vrot.lane.b32.xlu0 %v498, 111
  %v618 = vpop.permute.xlu0 %617
  %v619 = vsel %vm313, %v616, %v618
  %v620 = vsel %vm313, %v614, %v616
  %v621 = vsel %vm313, %v612, %v614
  %v622 = vsel %vm313, %v618, %v612
  %v623 = vmul.f32 %v621, %v124
  %v624 = vmul.f32 %v620, %v125
  %v625 = vmul.f32 %v619, %v126
  %v626 = vmul.f32 %v622, %v127
  %v627 = vpack.c.bf16 %v527, %v511
  %v628 = vpack.c.bf16 %v528, %v512
  %v629 = vpack.c.bf16 %v529, %v513
  %v630 = vpack.c.bf16 %v530, %v514
  %v631 = vpack.c.bf16 %v559, %v543
  %v632 = vpack.c.bf16 %v560, %v544
  %v633 = vpack.c.bf16 %v561, %v545
  %v634 = vpack.c.bf16 %v562, %v546
  %v635 = vpack.c.bf16 %v575, %v495
  %v636 = vpack.c.bf16 %v576, %v496
  %v637 = vpack.c.bf16 %v577, %v497
  %v638 = vpack.c.bf16 %v578, %v498
  %v639 = vpack.c.bf16 %v607, %v591
  %v640 = vpack.c.bf16 %v608, %v592
  %v641 = vpack.c.bf16 %v609, %v593
  %v642 = vpack.c.bf16 %v610, %v594
  %v643 = vpack.c.bf16 %v623, %v623
  %v644 = vpack.c.bf16 %v624, %v624
  %v645 = vpack.c.bf16 %v625, %v625
  %v646 = vpack.c.bf16 %v626, %v626
  %v648 = vsel %vm347, %v130, 0
  %v651 = vsel %vm351, %v643, 0
  %v654 = vsel %vm351, %v644, 0
  %v657 = vsel %vm351, %v645, 0
  %v660 = vsel %vm351, %v646, 0
  %662 = vmatprep.subr.bf16.mxu0 0
  %663 = vmatpush1.bf16.msra.mxu0 0
  %664 = vmatprep.subr.bf16.mxu0 0
  %665 = vmatpush1.bf16.msra.mxu0 0
  %666 = vmatprep.subr.bf16.mxu0 0
  %667 = vmatpush1.bf16.msra.mxu0 0
  %668 = vmatprep.subr.bf16.mxu0 %v654
  %669 = vmatpush1.bf16.msra.mxu0 %v651
  %670 = vmatprep.subr.bf16.mxu0 %v640
  %671 = vmatpush1.bf16.msra.mxu0 %v639
  %672 = vmatprep.subr.bf16.mxu0 %v636
  %673 = vmatpush1.bf16.msra.mxu0 %v635
  %674 = vmatprep.subr.bf16.mxu0 %v632
  %675 = vmatpush1.bf16.msra.mxu0 %v631
  %676 = vmatprep.subr.bf16.mxu0 %v628
  %677 = vmatpush1.bf16.msra.mxu0 %v627
  %678 = vmatprep.subr.bf16.mxu0 0
  %679 = vmatpush2.bf16.msra.mxu0 0
  %680 = vmatprep.subr.bf16.mxu0 0
  %681 = vmatpush2.bf16.msra.mxu0 0
  %682 = vmatprep.subr.bf16.mxu0 0
  %683 = vmatpush2.bf16.msra.mxu0 0
  %684 = vmatprep.subr.bf16.mxu0 0
  %685 = vmatpush2.bf16.msra.mxu0 0
  %686 = vmatprep.subr.bf16.mxu0 0
  %687 = vmatpush2.bf16.msra.mxu0 0
  %688 = vmatprep.subr.bf16.mxu0 0
  %689 = vmatpush2.bf16.msra.mxu0 0
  %690 = vmatprep.subr.bf16.mxu0 0
  %691 = vmatpush2.bf16.msra.mxu0 0
  %692 = vmatprep.subr.bf16.mxu0 0
  %693 = vmatpush2.bf16.msra.mxu0 0
  %694 = vmatprep.mubr.bf16.mxu0 0
  %695 = vmatmul.mubr.bf16.gmra.mxu0 %v648
  %v696 = vpop.f32.mrf.mxu0
  %v697 = vadd.f32 0.0, %v696
  %v698 = vpop.f32.mrf.mxu0
  %v699 = vadd.f32 0.0, %v698
  %v700 = vpop.f32.mrf.mxu0
  %v701 = vpop.f32.mrf.mxu0
  %702 = vdwg.mxu0
  %703 = vmatprep.subr.bf16.mxu0 0
  %704 = vmatpush1.bf16.msra.mxu0 0
  %705 = vmatprep.subr.bf16.mxu0 0
  %706 = vmatpush1.bf16.msra.mxu0 0
  %707 = vmatprep.subr.bf16.mxu0 0
  %708 = vmatpush1.bf16.msra.mxu0 0
  %709 = vmatprep.subr.bf16.mxu0 %v660
  %710 = vmatpush1.bf16.msra.mxu0 %v657
  %711 = vmatprep.subr.bf16.mxu0 %v642
  %712 = vmatpush1.bf16.msra.mxu0 %v641
  %713 = vmatprep.subr.bf16.mxu0 %v638
  %714 = vmatpush1.bf16.msra.mxu0 %v637
  %715 = vmatprep.subr.bf16.mxu0 %v634
  %716 = vmatpush1.bf16.msra.mxu0 %v633
  %717 = vmatprep.subr.bf16.mxu0 %v630
  %718 = vmatpush1.bf16.msra.mxu0 %v629
  %719 = vmatprep.subr.bf16.mxu0 0
  %720 = vmatpush2.bf16.msra.mxu0 0
  %721 = vmatprep.subr.bf16.mxu0 0
  %722 = vmatpush2.bf16.msra.mxu0 0
  %723 = vmatprep.subr.bf16.mxu0 0
  %724 = vmatpush2.bf16.msra.mxu0 0
  %725 = vmatprep.subr.bf16.mxu0 0
  %726 = vmatpush2.bf16.msra.mxu0 0
  %727 = vmatprep.subr.bf16.mxu0 0
  %728 = vmatpush2.bf16.msra.mxu0 0
  %729 = vmatprep.subr.bf16.mxu0 0
  %730 = vmatpush2.bf16.msra.mxu0 0
  %731 = vmatprep.subr.bf16.mxu0 0
  %732 = vmatpush2.bf16.msra.mxu0 0
  %733 = vmatprep.subr.bf16.mxu0 0
  %734 = vmatpush2.bf16.msra.mxu0 0
  %735 = vmatprep.mubr.bf16.mxu0 0
  %736 = vmatmul.mubr.bf16.gmra.mxu0 %v648
  %v737 = vpop.f32.mrf.mxu0
  %v738 = vadd.f32 0.0, %v737
  %v739 = vpop.f32.mrf.mxu0
  %v740 = vadd.f32 0.0, %v739
  %v741 = vpop.f32.mrf.mxu0
  %v742 = vpop.f32.mrf.mxu0
  %743 = vdwg.mxu0
  %v744 = vmul.f32 %v697, 0.2
  %v745 = vmul.f32 %v699, 0.2
  %v746 = vmul.f32 %v738, 0.2
  %v747 = vmul.f32 %v740, 0.2
  %v748 = vadd.f32 %v744, %v403
  %v749 = vadd.f32 %v745, %v405
  %v750 = vadd.f32 %v746, %v446
  %v751 = vadd.f32 %v747, %v448
  %753 = vset.pattern.permute.xlu0 4
  %754 = vperm.xlu0 %753, %v131
  %v755 = vpop.permute.xlu0 %754
  %v757 = vadd.f32 %v748, %v755
  %v758 = vadd.f32 %v749, %v755
  %v759 = vadd.f32 %v750, %v755
  %v760 = vadd.f32 %v751, %v755
  %761 = vst [vmem:[%s3] sm:$0xff] %v757
  %762 = vst [vmem:[%s3 + $0x8] sm:$0xff] %v758
  %s763 = scalar_lea.vmem %s3, 16
  %764 = vst [vmem:[%s763] sm:$0xff] %v759
  %765 = vst [vmem:[%s763 + $0x8] sm:$0xff] %v760
  // Predicated region
  $region14: #{wide_block_forward.1} parent=0 // pred_check
    _
  $region15: #{wide_block_forward.1} parent=0 // pred_check_branch
    %767 = sbr.rel (0) target = $region17
  $region16: #{wide_block_forward.1} parent=0 // pred_region
    _
  $region17: #{wide_block_forward.1} parent=0 // pred_fallthru
    _
  // Predicated region
  $region18: #{wide_block_forward.1} parent=0 // pred_check
    _
  $region19: #{wide_block_forward.1} parent=0 // pred_check_branch
    %769 = sbr.rel (0) target = $region21
  $region20: #{wide_block_forward.1} parent=0 // pred_region
    _
  $region21: #{wide_block_forward.1} parent=0 // pred_fallthru
    _

</llo_original>
